<compile_context>
chip_gen: v7x
topology: tpu7x:2x2x1
jax: 0.10.0
libtpu: 0.0.40
codegen_flags: <defaults>
</compile_context>

<pallas_src>
import functools

import jax
import jax.numpy as jnp
from jax import lax
from jax.experimental import pallas as pl
from jax.experimental.pallas import tpu as pltpu


# =========================== Pallas kernels ===========================

def _conv3x3_kernel(x_ref, w_ref, o_ref, *, Wp, Lo):
    """Fused im2col 3x3 conv (stride 1).
    x_ref: (1, Cin, Lp) f32  -- padded input, rows flattened (pad: 1 top/left, 2 bottom, 1 right)
    w_ref: (9, CoutT, Cin) bf16 -- per-tap weight matrices
    o_ref: (1, CoutT, Lo) f32  -- Lo = H*Wp; the 2 border columns per row are
                                  garbage and sliced off in the wrapper."""
    x = x_ref[0]
    acc = jnp.zeros(o_ref.shape[1:], jnp.float32)
    for t in range(9):                       # unrolled tap loop, 9 MXU GEMMs
        off = (t // 3) * Wp + (t % 3)
        xs = x[:, off:off + Lo].astype(jnp.bfloat16)
        acc = acc + jnp.dot(w_ref[t], xs, preferred_element_type=jnp.float32)
    o_ref[0] = acc


def conv3x3(x, w, stride=1):
    """3x3 conv, padding=1, bias=False.  x: (B,Cin,H,W), w: (Cout,Cin,3,3)."""
    B, C, H, W = x.shape
    Cout = w.shape[0]
    Wp = W + 2
    Lp = (H + 3) * Wp          # pad rows (1 top, 2 bottom) -> guards flat-tap overrun
    Lo = H * Wp
    xp = jnp.pad(x, ((0, 0), (0, 0), (1, 2), (1, 1))).reshape(B, C, Lp)
    w9 = jnp.transpose(w, (2, 3, 0, 1)).reshape(9, Cout, C).astype(jnp.bfloat16)
    ct = min(Cout, 128)
    nco = Cout // ct
    out = pl.pallas_call(
        functools.partial(_conv3x3_kernel, Wp=Wp, Lo=Lo),
        out_shape=jax.ShapeDtypeStruct((B, Cout, Lo), jnp.float32),
        grid=(B, nco),
        in_specs=[pl.BlockSpec((1, C, Lp), lambda b, co: (b, 0, 0)),
                  pl.BlockSpec((9, ct, C), lambda b, co: (0, co, 0))],
        out_specs=pl.BlockSpec((1, ct, Lo), lambda b, co: (b, co, 0)),
        compiler_params=pltpu.CompilerParams(
            dimension_semantics=("parallel", "parallel")),
    )(xp, w9)
    out = out.reshape(B, Cout, H, Wp)
    # stride handled by subsampling the stride-1 result (exact for pad=1 convs).
    return out[:, :, ::stride, :W:stride]


def _conv1x1_kernel(x_ref, w_ref, b_ref, o_ref):
    x = x_ref[0].astype(jnp.bfloat16)                 # (Cin, L)
    y = jnp.dot(w_ref[...], x, preferred_element_type=jnp.float32)
    o_ref[0] = y + b_ref[...]


def conv1x1(x, w, stride=1, bias=None):
    """1x1 conv.  x: (B,Cin,H,W), w: (Cout,Cin,1,1)."""
    if stride != 1:
        x = x[:, :, ::stride, ::stride]
    B, C, H, W = x.shape
    Cout = w.shape[0]
    L = H * W
    xr = x.reshape(B, C, L)
    wm = w.reshape(Cout, C).astype(jnp.bfloat16)
    bvec = (jnp.zeros((Cout, 1), jnp.float32) if bias is None
            else bias.reshape(Cout, 1).astype(jnp.float32))
    ct = min(Cout, 128)
    nco = Cout // ct
    out = pl.pallas_call(
        _conv1x1_kernel,
        out_shape=jax.ShapeDtypeStruct((B, Cout, L), jnp.float32),
        grid=(B, nco),
        in_specs=[pl.BlockSpec((1, C, L), lambda b, co: (b, 0, 0)),
                  pl.BlockSpec((ct, C), lambda b, co: (co, 0)),
                  pl.BlockSpec((ct, 1), lambda b, co: (co, 0))],
        out_specs=pl.BlockSpec((1, ct, L), lambda b, co: (b, co, 0)),
        compiler_params=pltpu.CompilerParams(
            dimension_semantics=("parallel", "parallel")),
    )(xr, wm, bvec)
    return out.reshape(B, Cout, H, W)


def _gn_relu_kernel(x_ref, g_ref, b_ref, gm_ref, gmt_ref, o_ref):
    """Fused GroupNorm(16)+ReLU, per batch.  x: (C, L) f32.
    gm/gmt are tiny 0/1 grouping matrices (G,C)/(C,G) used to reduce per-channel
    stats to per-group stats and broadcast them back without layout reshapes."""
    x = x_ref[0]
    C, L = x.shape
    G = gm_ref.shape[0]
    n = jnp.float32((C // G) * L)
    s1 = jnp.sum(x, axis=1, keepdims=True)            # (C,1)
    s2 = jnp.sum(x * x, axis=1, keepdims=True)        # (C,1)
    gs1 = jnp.dot(gm_ref[...], s1, preferred_element_type=jnp.float32,
                  precision=lax.Precision.HIGHEST)    # (G,1)
    gs2 = jnp.dot(gm_ref[...], s2, preferred_element_type=jnp.float32,
                  precision=lax.Precision.HIGHEST)
    gmean = gs1 / n
    gvar = gs2 / n - gmean * gmean
    rstd = lax.rsqrt(gvar + 1e-5)
    mean_c = jnp.dot(gmt_ref[...], gmean, preferred_element_type=jnp.float32,
                     precision=lax.Precision.HIGHEST)  # (C,1)
    rstd_c = jnp.dot(gmt_ref[...], rstd, preferred_element_type=jnp.float32,
                     precision=lax.Precision.HIGHEST)
    y = (x - mean_c) * (rstd_c * g_ref[...]) + b_ref[...]
    o_ref[0] = jnp.maximum(y, 0.0)


_GROUPS = 16


def gn_relu(x, gamma, beta):
    """Fused GroupNorm(16) + ReLU.  x: (B,C,H,W)."""
    B, C, H, W = x.shape
    L = H * W
    G = _GROUPS
    cg = C // G
    xr = x.reshape(B, C, L).astype(jnp.float32)
    g = gamma.reshape(C, 1).astype(jnp.float32)
    b = beta.reshape(C, 1).astype(jnp.float32)
    gmat = (jnp.arange(G)[:, None] ==
            (jnp.arange(C)[None, :] // cg)).astype(jnp.float32)       # (G,C)
    gmatt = gmat.T                                                    # (C,G)
    out = pl.pallas_call(
        _gn_relu_kernel,
        out_shape=jax.ShapeDtypeStruct((B, C, L), jnp.float32),
        grid=(B,),
        in_specs=[pl.BlockSpec((1, C, L), lambda i: (i, 0, 0)),
                  pl.BlockSpec((C, 1), lambda i: (0, 0)),
                  pl.BlockSpec((C, 1), lambda i: (0, 0)),
                  pl.BlockSpec((G, C), lambda i: (0, 0)),
                  pl.BlockSpec((C, G), lambda i: (0, 0))],
        out_specs=pl.BlockSpec((1, C, L), lambda i: (i, 0, 0)),
        compiler_params=pltpu.CompilerParams(
            dimension_semantics=("parallel",)),
    )(xr, g, b, gmat, gmatt)
    return out.reshape(B, C, H, W)


def _attn_kernel(coord_ref, feat_ref, o_ref):
    # TODO(synk): for large H*W tile over the key axis with an online-softmax
    # (flash) accumulator; at this model's attention resolution L = (H/8)*(W/8)
    # the full score matrix easily fits in VMEM.
    f = feat_ref[0].astype(jnp.bfloat16)               # (C, L)
    # s[l,m] = sum_c f[c,l]*f[c,m]   (matches bmm(feature^T, feature))
    s = lax.dot_general(f, f, (((0,), (0,)), ((), ())),
                        preferred_element_type=jnp.float32)            # (L, L)
    s = s - jnp.max(s, axis=-1, keepdims=True)
    e = jnp.exp(s)
    p = e / jnp.sum(e, axis=-1, keepdims=True)
    # out[c,l] = sum_m coord[c,m] * p[m,l]   (matches bmm(coord, softmax(S,-1)))
    o_ref[0] = jnp.dot(coord_ref[0].astype(jnp.bfloat16),
                       p.astype(jnp.bfloat16),
                       preferred_element_type=jnp.float32)


def point_attention(coord_feature, feature):
    B, C, H, W = feature.shape
    L = H * W
    cf = coord_feature.reshape(B, C, L).astype(jnp.float32)
    f = feature.reshape(B, C, L).astype(jnp.float32)
    out = pl.pallas_call(
        _attn_kernel,
        out_shape=jax.ShapeDtypeStruct((B, C, L), jnp.float32),
        grid=(B,),
        in_specs=[pl.BlockSpec((1, C, L), lambda i: (i, 0, 0)),
                  pl.BlockSpec((1, C, L), lambda i: (i, 0, 0))],
        out_specs=pl.BlockSpec((1, C, L), lambda i: (i, 0, 0)),
        compiler_params=pltpu.CompilerParams(
            dimension_semantics=("parallel",)),
    )(cf, f)
    return out.reshape(B, C, H, W)


def _heads_kernel(x_ref, w1_ref, b1_ref, w2_ref, b2_ref, w3_ref, b3_ref, o_ref):
    x = x_ref[0]                                       # (8, HW) -- lane dim = HW
    y = jnp.dot(w1_ref[0], x, preferred_element_type=jnp.float32) + b1_ref[0]
    y = jnp.maximum(y, 0.0)
    y = jnp.dot(w2_ref[0], y, preferred_element_type=jnp.float32) + b2_ref[0]
    y = jnp.maximum(y, 0.0)
    o_ref[0] = jnp.dot(w3_ref[0], y,
                       preferred_element_type=jnp.float32) + b3_ref[0]


def heads_forward_pallas(head_inputs, dyn_params):
    """Dynamic grouped-1x1-conv segmentation head.
    head_inputs: (B,8,H,W), dyn_params: (B,153)."""
    B, _, H, W = head_inputs.shape
    HW = H * W
    x = head_inputs.reshape(B, 8, HW)                  # NCHW-native, no transpose
    w1 = dyn_params[:, 0:64].reshape(B, 8, 8)
    w2 = dyn_params[:, 64:128].reshape(B, 8, 8)
    w3 = dyn_params[:, 128:136].reshape(B, 1, 8)
    b1 = dyn_params[:, 136:144].reshape(B, 8, 1)
    b2 = dyn_params[:, 144:152].reshape(B, 8, 1)
    b3 = dyn_params[:, 152:153].reshape(B, 1, 1)
    out = pl.pallas_call(
        _heads_kernel,
        out_shape=jax.ShapeDtypeStruct((B, 1, HW), jnp.float32),
        grid=(B,),
        in_specs=[pl.BlockSpec((1, 8, HW), lambda i: (i, 0, 0)),
                  pl.BlockSpec((1, 8, 8), lambda i: (i, 0, 0)),
                  pl.BlockSpec((1, 8, 1), lambda i: (i, 0, 0)),
                  pl.BlockSpec((1, 8, 8), lambda i: (i, 0, 0)),
                  pl.BlockSpec((1, 8, 1), lambda i: (i, 0, 0)),
                  pl.BlockSpec((1, 1, 8), lambda i: (i, 0, 0)),
                  pl.BlockSpec((1, 1, 1), lambda i: (i, 0, 0))],
        out_specs=pl.BlockSpec((1, 1, HW), lambda i: (i, 0, 0)),
        compiler_params=pltpu.CompilerParams(
            dimension_semantics=("parallel",)),
    )(x, w1, b1, w2, b2, w3, b3)
    return out.reshape(B, 1, H, W)


# ======================= misc glue =======================

def upsample2x(x):
    # TODO(synk): could be folded into the following conv's index_map (read h//2,w//2).
    return jnp.repeat(jnp.repeat(x, 2, axis=2), 2, axis=3)


# ======================= NoBottleneck / layers =======================

def nobottleneck_fwd(x, p):
    s = p['stride']
    out = gn_relu(x, p['gn1_g'], p['gn1_b'])
    out = conv3x3(out, p['conv1_w'], s)
    out = gn_relu(out, p['gn2_g'], p['gn2_b'])
    out = conv3x3(out, p['conv2_w'], 1)
    if 'ds_conv_w' in p:
        r = gn_relu(x, p['ds_gn_g'], p['ds_gn_b'])
        residual = conv1x1(r, p['ds_conv_w'], s)
    else:
        residual = x
    return out + residual


def layer_fwd(x, blocks):
    for p in blocks:
        x = nobottleneck_fwd(x, p)
    return x


# ======================= DistMaps (RITM-style disks) =======================
# TODO(synk): DistMaps class source not provided; implemented RITM-style disk
# encoding (use_disks=True, norm_radius=5, spatial_scale=1.0) in plain JAX.

def dist_maps_disks(points, H, W, norm_radius=5.0):
    """points: (B, 2P, 3) = [y, x, idx]; rows with y<0 are invalid. -> (B,2,H,W)."""
    B, n, _ = points.shape
    P = n // 2
    rows = jnp.arange(H, dtype=jnp.float32)[:, None]
    cols = jnp.arange(W, dtype=jnp.float32)[None, :]

    def group(pts):
        valid = pts[..., 0] >= 0.0
        dy = rows[None, None] - pts[..., 0][..., None, None]
        dx = cols[None, None] - pts[..., 1][..., None, None]
        d2 = dy * dy + dx * dx
        d2 = jnp.where(valid[..., None, None], d2, jnp.inf)
        d2min = jnp.min(d2, axis=1)
        return (d2min <= norm_radius ** 2).astype(jnp.float32)

    pos = group(points[:, :P])
    neg = group(points[:, P:])
    return jnp.stack([pos, neg], axis=1)


# ======================= parameter init =======================

class KeyGen:
    def __init__(self, seed=0):
        self.key = jax.random.PRNGKey(seed)

    def __call__(self):
        self.key, sub = jax.random.split(self.key)
        return sub


def init_block(kg, inplanes, planes, stride, scale=0.05):
    p = {
        'stride': stride,
        'gn1_g': jnp.ones((inplanes,), jnp.float32),
        'gn1_b': jnp.zeros((inplanes,), jnp.float32),
        'conv1_w': scale * jax.random.normal(kg(), (planes, inplanes, 3, 3), jnp.float32),
        'gn2_g': jnp.ones((planes,), jnp.float32),
        'gn2_b': jnp.zeros((planes,), jnp.float32),
        'conv2_w': scale * jax.random.normal(kg(), (planes, planes, 3, 3), jnp.float32),
    }
    if stride != 1 or inplanes != planes:
        p['ds_gn_g'] = jnp.ones((inplanes,), jnp.float32)
        p['ds_gn_b'] = jnp.zeros((inplanes,), jnp.float32)
        p['ds_conv_w'] = scale * jax.random.normal(
            kg(), (planes, inplanes, 1, 1), jnp.float32)
    return p


def init_layer(kg, inplanes, planes, blocks, stride):
    layer = [init_block(kg, inplanes, planes, stride)]
    for _ in range(1, blocks):
        layer.append(init_block(kg, planes, planes, 1))
    return layer


def init_params(kg, layers, scale=0.05):
    P = {}
    P['conv1_w'] = scale * jax.random.normal(kg(), (32, 3, 3, 3), jnp.float32)
    P['conv2_w'] = scale * jax.random.normal(kg(), (32, 3, 1, 1), jnp.float32)
    P['layer0_click'] = init_layer(kg, 32, 32, layers[0], 1)
    P['layer1_click'] = init_layer(kg, 32, 64, layers[1], 2)
    P['layer2_click'] = init_layer(kg, 64, 128, layers[2], 2)
    P['layer3_click'] = init_layer(kg, 128, 256, layers[3], 2)
    P['layer0'] = init_layer(kg, 32, 32, layers[0], 1)
    P['layer1'] = init_layer(kg, 32, 64, layers[1], 2)
    P['layer2'] = init_layer(kg, 64, 128, layers[2], 2)
    P['layer3'] = init_layer(kg, 128, 256, layers[3], 2)
    P['layer4'] = init_layer(kg, 256, 256, layers[4], 2)
    P['fusion_gn_g'] = jnp.ones((256,), jnp.float32)
    P['fusion_gn_b'] = jnp.zeros((256,), jnp.float32)
    P['fusion_conv_w'] = scale * jax.random.normal(kg(), (256, 256, 1, 1), jnp.float32)
    P['x8_resb'] = init_layer(kg, 256, 128, 1, 1)
    P['x4_resb'] = init_layer(kg, 128, 64, 1, 1)
    P['x2_resb'] = init_layer(kg, 64, 32, 1, 1)
    P['x1_resb'] = init_layer(kg, 32, 32, 1, 1)
    P['precls_gn_g'] = jnp.ones((32,), jnp.float32)
    P['precls_gn_b'] = jnp.zeros((32,), jnp.float32)
    P['precls_conv_w'] = scale * jax.random.normal(kg(), (8, 32, 1, 1), jnp.float32)
    P['precls_conv_b'] = jnp.zeros((8,), jnp.float32)
    P['cam2_g'] = jnp.ones((256,), jnp.float32)
    P['cam2_b'] = jnp.zeros((256,), jnp.float32)
    P['cam_conv_w'] = scale * jax.random.normal(kg(), (256, 256, 1, 1), jnp.float32)
    P['cam_conv_b'] = jnp.zeros((256,), jnp.float32)
    P['gap_g'] = jnp.ones((256,), jnp.float32)
    P['gap_b'] = jnp.zeros((256,), jnp.float32)
    P['cls_w'] = scale * jax.random.normal(kg(), (6, 256), jnp.float32)
    P['cls_b'] = jnp.zeros((6,), jnp.float32)
    P['controller_w'] = scale * jax.random.normal(kg(), (153, 262, 1, 1), jnp.float32)
    P['controller_b'] = jnp.zeros((153,), jnp.float32)
    return P


# ======================= full forward =======================

def unet2d_forward(P, inp, click_idx, point, pred, s_num_classes=1):
    B, _, H, W = inp.shape

    coord = dist_maps_disks(point, H, W)                      # (B,2,H,W)
    coord = jnp.concatenate([coord, pred], axis=1)            # (B,3,H,W)
    coord_features = conv1x1(coord, P['conv2_w'])             # (B,32,H,W)

    x = conv3x3(inp, P['conv1_w'], 1)                         # (B,32,H,W)
    x_c = layer_fwd(x + coord_features, P['layer0_click'])
    x = layer_fwd(x, P['layer0'])
    skip0 = x_c
    x_c = layer_fwd(x_c + x, P['layer1_click'])
    x = layer_fwd(x + skip0, P['layer1'])
    skip1 = x_c
    x_c = layer_fwd(x_c + x, P['layer2_click'])
    x = layer_fwd(x + skip1, P['layer2'])
    skip2 = x_c
    x_c = layer_fwd(x_c + x, P['layer3_click'])
    x = layer_fwd(x + skip2, P['layer3'])
    skip3 = x_c

    # CAM branch
    x_cam = gn_relu(x, P['cam2_g'], P['cam2_b'])              # cam_layer_2
    x_cam = conv1x1(x_cam, P['cam_conv_w'], bias=P['cam_conv_b'])

    task_encoding = jnp.zeros((B, 6), jnp.float32).at[:, click_idx].set(1.0)

    # GAP = GN + ReLU + AdaptiveAvgPool(1,1)
    x_cls = gn_relu(x_cam, P['gap_g'], P['gap_b'])
    x_cls = jnp.mean(x_cls, axis=(2, 3))                      # (B,256)

    # tiny tail matmuls -> plain jnp/XLA (below one MXU pass)
    x_cond = jnp.concatenate([x_cls, task_encoding], axis=1)  # (B,262)
    dyn_params = (x_cond @ P['controller_w'].reshape(153, 262).T
                  + P['controller_b'][None, :])               # (B,153)

    classifier = x_cls @ P['cls_w'].T + P['cls_b'][None, :]   # (B,6)
    pred_class_idx = jnp.argmax(classifier, axis=1)
    wsel = P['cls_w'][pred_class_idx]                         # (B,256)
    cam = wsel[:, :, None, None] * x_cam

    fusion_feature = point_attention(x_c, cam)

    x = layer_fwd(x + x_c + fusion_feature, P['layer4'])

    # fusionConv
    x = gn_relu(x, P['fusion_gn_g'], P['fusion_gn_b'])
    x = conv1x1(x, P['fusion_conv_w'])

    x = upsample2x(x)
    x = x + skip3
    x = layer_fwd(x, P['x8_resb'])
    x = upsample2x(x)
    x = x + skip2
    x = layer_fwd(x, P['x4_resb'])
    x = upsample2x(x)
    x = x + skip1
    x = layer_fwd(x, P['x2_resb'])
    x = upsample2x(x)
    x = x + skip0
    x = layer_fwd(x, P['x1_resb'])

    # precls_conv
    head_inputs = gn_relu(x, P['precls_gn_g'], P['precls_gn_b'])
    head_inputs = conv1x1(head_inputs, P['precls_conv_w'],
                          bias=P['precls_conv_b'])             # (B,8,H,W)

    logits = heads_forward_pallas(head_inputs, dyn_params)     # (B,1,H,W)
    return logits.reshape(-1, s_num_classes, H, W)


# ======================= main =======================

if __name__ == "__main__":
    kg = KeyGen(0)
    layers = [1, 1, 1, 1, 1]          # small synthetic config
    params = init_params(kg, layers)

    key = jax.random.PRNGKey(0)
    k1, k2 = jax.random.split(key)
    B, H, W = 2, 16, 16
    inp = jax.random.normal(k1, (B, 3, H, W), jnp.float32)
    pred = jax.random.uniform(k2, (B, 1, H, W), jnp.float32)
    # points: (B, 2*P, 3) = [y, x, idx]; first half positive clicks, second
    # negative; rows with y<0 are invalid.
    point = jnp.array([
        [[4., 4., 0.], [10., 12., 1.], [-1., -1., -1.], [7., 2., 0.]],
        [[8., 8., 0.], [-1., -1., -1.], [3., 13., 0.], [-1., -1., -1.]],
    ], dtype=jnp.float32)
    click_idx = 2

    logits = unet2d_forward(params, inp, click_idx, point, pred)
    logits = jax.block_until_ready(logits)
    assert logits.shape == (B, 1, H, W)
    assert bool(jnp.all(jnp.isfinite(logits)))
    print("KERNEL_OK")
</pallas_src>

<mosaic_0001>
module attributes {stable_mosaic.version = 11 : i64} {
  func.func @_conv1x1_kernel(%arg0: i32, %arg1: i32, %arg2: memref<1x3x256xf32, #tpu.memory_space<vmem>>, %arg3: memref<32x3xbf16, #tpu.memory_space<vmem>>, %arg4: memref<32x1xf32, #tpu.memory_space<vmem>>, %arg5: memref<1x32x256xf32, #tpu.memory_space<vmem>>) attributes {dimension_semantics = [#tpu.dimension_semantics<parallel>, #tpu.dimension_semantics<parallel>], iteration_bounds = array<i64: 2, 1>, scalar_prefetch = 0 : i64, scratch_operands = 0 : i64, tpu.core_type = #tpu.core_type<tc>, window_params = [{transform_indices = @transform_0, window_bounds = array<i64: 1, 3, 256>}, {transform_indices = @transform_1, window_bounds = array<i64: 32, 3>}, {transform_indices = @transform_2, window_bounds = array<i64: 32, 1>}, {transform_indices = @transform_3, window_bounds = array<i64: 1, 32, 256>}]} {
    %c0 = arith.constant 0 : index
    %c0_0 = arith.constant 0 : index
    %c0_1 = arith.constant 0 : index
    %0 = vector.load %arg2[%c0, %c0_0, %c0_1] : memref<1x3x256xf32, #tpu.memory_space<vmem>>, vector<1x3x256xf32>
    %1 = vector.shape_cast %0 : vector<1x3x256xf32> to vector<3x256xf32>
    %2 = arith.truncf %1 : vector<3x256xf32> to vector<3x256xbf16>
    %c0_2 = arith.constant 0 : index
    %c0_3 = arith.constant 0 : index
    %3 = vector.load %arg3[%c0_2, %c0_3] : memref<32x3xbf16, #tpu.memory_space<vmem>>, vector<32x3xbf16>
    %cst = arith.constant dense<0.000000e+00> : vector<32x256xf32>
    %4 = tpu.matmul %3, %2, %cst {dimension_numbers = #tpu.dot_dimension_numbers<[1], [0], [0], [1], [0, 0, 1, 1], [], []>} : vector<32x3xbf16>, vector<3x256xbf16>, vector<32x256xf32> -> vector<32x256xf32>
    %c0_4 = arith.constant 0 : index
    %c0_5 = arith.constant 0 : index
    %5 = vector.load %arg4[%c0_4, %c0_5] : memref<32x1xf32, #tpu.memory_space<vmem>>, vector<32x1xf32>
    %6 = vector.broadcast %5 : vector<32x1xf32> to vector<32x256xf32>
    %7 = arith.addf %4, %6 : vector<32x256xf32>
    %c0_6 = arith.constant 0 : index
    %c0_7 = arith.constant 0 : index
    %c0_8 = arith.constant 0 : index
    %8 = vector.load %arg5[%c0_6, %c0_7, %c0_8] : memref<1x32x256xf32, #tpu.memory_space<vmem>>, vector<1x32x256xf32>
    %9 = vector.shape_cast %8 : vector<1x32x256xf32> to vector<32x256xf32>
    %10 = vector.shape_cast %7 : vector<32x256xf32> to vector<1x32x256xf32>
    tpu.vector_store %arg5[%c0_6, %c0_7, %c0_8], %10 {strides = array<i32>} : memref<1x32x256xf32, #tpu.memory_space<vmem>>, vector<1x32x256xf32>,
    return
  }
  func.func @transform_0(%arg0: i32, %arg1: i32) -> (i32, i32, i32) {
    %c0_i32 = arith.constant 0 : i32
    %c0_i32_0 = arith.constant 0 : i32
    %c0_i32_1 = arith.constant 0 : i32
    return %arg0, %c0_i32, %c0_i32_0 : i32, i32, i32
  }
  func.func @transform_1(%arg0: i32, %arg1: i32) -> (i32, i32) {
    %c0_i32 = arith.constant 0 : i32
    %c0_i32_0 = arith.constant 0 : i32
    return %arg1, %c0_i32 : i32, i32
  }
  func.func @transform_2(%arg0: i32, %arg1: i32) -> (i32, i32) {
    %c0_i32 = arith.constant 0 : i32
    %c0_i32_0 = arith.constant 0 : i32
    return %arg1, %c0_i32 : i32, i32
  }
  func.func @transform_3(%arg0: i32, %arg1: i32) -> (i32, i32, i32) {
    %c0_i32 = arith.constant 0 : i32
    %c0_i32_0 = arith.constant 0 : i32
    return %arg0, %arg1, %c0_i32 : i32, i32, i32
  }
}

</mosaic_0001>

<llo_original>
// kernel: tpu_custom_call.1
$region0: #{tpu_custom_call.1}
  #allocation0 [shape = 'u32[]', space=smem, size = 0x4, offset = 0x4, fixed_abs, tag = 'smem constant byte address 0x4 - core index']
  #allocation1 [shape = 'u32[144,128]{1,0:T(1,128)}', space=vmem, size = 0x12000, scoped, tag = 'internal scratch']
  %s0 = inlined_call_operand.vmem [shape: f32[2,3,256], index: 0, kind: input, shape index: {}]
  %s1 = inlined_call_operand.vmem [shape: bf16[32,3], index: 1, kind: input, shape index: {}]
  %s2 = inlined_call_operand.vmem [shape: f32[32,1], index: 2, kind: input, shape index: {}]
  %s3 = inlined_call_operand.hbm [shape: f32[2,32,256], index: 3, kind: output, shape index: {}]
  %s4 = sld [smem:[#allocation0]]
  $region45: #{tpu_custom_call.1} parent=0
    _
  %s6 = ssub.s32 1, %s4
  %s7 = scalar_select 0, %s6, %s4
  $region1: #{tpu_custom_call.1} parent=0
    #allocation2 [shape = 'u8[65536]{0}', space=vmem, size = 0x10000, scoped, tag = 'output window, operand 0']
    #allocation3 [shape = 's32[2]{0}', space=sflag, size = 0x8, scoped, tag = 'scoped memory for tpu_custom_call.1']
    %8 = vsyncpa [#allocation3], 0
    %s9 = scalar_lea.sflag [#allocation3], 1
    %10 = vsyncpa %s9, 0
    loop: start=0, step=1, limit=4
    $region2: #{tpu_custom_call.1} parent=1 // loop_pre_header
      _
    $region3: #{tpu_custom_call.1} parent=1 // loop_header
      %s12 = sphi 0, %s16
      %p13 = scmp.ge.s32.totalorder %s12, 4
      %s19 = sphi 0, %s31
      %s20 = sphi 0, %s27
      %s21 = sphi 0, %s19
      %s22 = sphi 0, %s20
      %s23 = sphi 0, %s21
      %s24 = sphi 0, %s22
      %s34 = sphi 0, %s36
      %s37 = sphi 0, %s34
      %s38 = sphi 0, %s37
      %s54 = sphi 0, %s38
      %s60 = sphi 0, %s62
      %s63 = sphi 0, %s60
      %s64 = sphi 0, %s63
      %s80 = sphi 0, %s64
      %s86 = sphi 0, %s88
      %s89 = sphi 0, %s86
      %s90 = sphi 0, %s89
      %s106 = sphi 0, %s90
      %s114 = sphi 0, %s116
      %s117 = sphi 0, %s114
      %s118 = sphi 0, %s117
      %s134 = sphi 0, %s118
    $region4: #{tpu_custom_call.1} parent=1 // loop_header_branch
      %15 = sbr.rel (%p13) target = $region8
    $region5: #{tpu_custom_call.1} parent=1 // loop_body
      %s17 = ssub.s32 %s12, 1
      %s18 = ssub.s32 %s12, 2
      %s25 = sadd.s32 1, %s20
      %p26 = scmp.ge.s32.totalorder %s25, 1
      %s27 = scalar_select %p26, 0, %s25
      %s28 = sadd.s32 1, %s19
      %s29 = scalar_select %p26, %s28, %s19
      %p30 = scmp.ge.s32.totalorder %s29, 2
      %s31 = scalar_select %p30, 0, %s29
      %s32 = ssub.s32 %s19, %s31
      %p33 = scmp.eq.s32.totalorder %s32, 0
      %s35 = sadd.s32 %s34, 1
      %s36 = scalar_select %p33, %s34, %s35
      %p39 = pneg %p33
      %p40 = scmp.eq.s32.totalorder %s12, 1
      %p41 = por %p39, %p40
      %p42 = scmp.ne.s32.totalorder %s34, %s37
      %p43 = scmp.eq.s32.totalorder %s12, 0
      %p44 = por %p42, %p43
      %p45 = scmp.ne.s32.totalorder %s34, %s37
      %p46 = scmp.eq.s32.totalorder %s17, 1
      %p47 = por %p45, %p46
      %p48 = scmp.ne.s32.totalorder %s37, %s38
      %p49 = scmp.eq.s32.totalorder %s17, 0
      %p50 = por %p48, %p49
      %p51 = scmp.ne.s32.totalorder %s37, %s38
      %p52 = scmp.eq.s32.totalorder %s18, 1
      %p53 = por %p51, %p52
      %p55 = scmp.ne.s32.totalorder %s38, %s54
      %p56 = scmp.eq.s32.totalorder %s18, 0
      %p57 = por %p55, %p56
      %s58 = ssub.s32 %s20, %s27
      %p59 = scmp.eq.s32.totalorder %s58, 0
      %s61 = sadd.s32 %s60, 1
      %s62 = scalar_select %p59, %s60, %s61
      %p65 = pneg %p59
      %p66 = scmp.eq.s32.totalorder %s12, 1
      %p67 = por %p65, %p66
      %p68 = scmp.ne.s32.totalorder %s60, %s63
      %p69 = scmp.eq.s32.totalorder %s12, 0
      %p70 = por %p68, %p69
      %p71 = scmp.ne.s32.totalorder %s60, %s63
      %p72 = scmp.eq.s32.totalorder %s17, 1
      %p73 = por %p71, %p72
      %p74 = scmp.ne.s32.totalorder %s63, %s64
      %p75 = scmp.eq.s32.totalorder %s17, 0
      %p76 = por %p74, %p75
      %p77 = scmp.ne.s32.totalorder %s63, %s64
      %p78 = scmp.eq.s32.totalorder %s18, 1
      %p79 = por %p77, %p78
      %p81 = scmp.ne.s32.totalorder %s64, %s80
      %p82 = scmp.eq.s32.totalorder %s18, 0
      %p83 = por %p81, %p82
      %s84 = ssub.s32 %s20, %s27
      %p85 = scmp.eq.s32.totalorder %s84, 0
      %s87 = sadd.s32 %s86, 1
      %s88 = scalar_select %p85, %s86, %s87
      %p91 = pneg %p85
      %p92 = scmp.eq.s32.totalorder %s12, 1
      %p93 = por %p91, %p92
      %p94 = scmp.ne.s32.totalorder %s86, %s89
      %p95 = scmp.eq.s32.totalorder %s12, 0
      %p96 = por %p94, %p95
      %p97 = scmp.ne.s32.totalorder %s86, %s89
      %p98 = scmp.eq.s32.totalorder %s17, 1
      %p99 = por %p97, %p98
      %p100 = scmp.ne.s32.totalorder %s89, %s90
      %p101 = scmp.eq.s32.totalorder %s17, 0
      %p102 = por %p100, %p101
      %p103 = scmp.ne.s32.totalorder %s89, %s90
      %p104 = scmp.eq.s32.totalorder %s18, 1
      %p105 = por %p103, %p104
      %p107 = scmp.ne.s32.totalorder %s90, %s106
      %p108 = scmp.eq.s32.totalorder %s18, 0
      %p109 = por %p107, %p108
      %s110 = ssub.s32 %s19, %s31
      %s111 = ssub.s32 %s20, %s27
      %s112 = sor.u32 %s110, %s111
      %p113 = scmp.eq.s32.totalorder %s112, 0
      %s115 = sadd.s32 %s114, 1
      %s116 = scalar_select %p113, %s114, %s115
      %p119 = pneg %p113
      %p120 = scmp.eq.s32.totalorder %s12, 1
      %p121 = por %p119, %p120
      %p122 = scmp.ne.s32.totalorder %s114, %s117
      %p123 = scmp.eq.s32.totalorder %s12, 0
      %p124 = por %p122, %p123
      %p125 = scmp.ne.s32.totalorder %s114, %s117
      %p126 = scmp.eq.s32.totalorder %s17, 1
      %p127 = por %p125, %p126
      %p128 = scmp.ne.s32.totalorder %s117, %s118
      %p129 = scmp.eq.s32.totalorder %s17, 0
      %p130 = por %p128, %p129
      %p131 = scmp.ne.s32.totalorder %s117, %s118
      %p132 = scmp.eq.s32.totalorder %s18, 1
      %p133 = por %p131, %p132
      %p135 = scmp.ne.s32.totalorder %s118, %s134
      %p136 = scmp.eq.s32.totalorder %s18, 0
      %p137 = por %p135, %p136
      %p138 = scmp.le.s32.totalorder 1, %s12
      %p139 = scmp.lt.s32.totalorder %s12, 3
      %p140 = pnand %p138, %p139
      %p141 = pneg %p140
      // Predicated region
      $region9: #{tpu_custom_call.1} parent=5 // pred_check
        _
      $region10: #{tpu_custom_call.1} parent=5 // pred_check_branch
        %143 = sbr.rel (%p140) target = $region12
      $region11: #{tpu_custom_call.1} parent=5 // pred_region
        %s144 = ssub.s32 %s12, 1
        // Predicated region
        $region13: #{tpu_custom_call.1} parent=11 // pred_check
          %p145 = pneg %p76
        $region14: #{tpu_custom_call.1} parent=11 // pred_check_branch
          %147 = sbr.rel (%p145) target = $region16
        $region15: #{tpu_custom_call.1} parent=11 // pred_region
          %s148 = smul.u32 4, %s22
          %p149 = scmp.lt.s32.totalorder %s148, 3
          %s150 = scalar_select %p149, %s148, 3
          %s151 = smul.addr %s150, 4
          %s152 = scalar_lea.vmem %s1, %s151
          %s153 = smul.u32 4, %s22
        $region16: #{tpu_custom_call.1} parent=11 // pred_fallthru
          _
        // Predicated region
        $region17: #{tpu_custom_call.1} parent=11 // pred_check
          %p154 = pneg %p102
        $region18: #{tpu_custom_call.1} parent=11 // pred_check_branch
          %156 = sbr.rel (%p154) target = $region20
        $region19: #{tpu_custom_call.1} parent=11 // pred_region
          %s157 = smul.u32 4, %s22
          %p158 = scmp.lt.s32.totalorder %s157, 3
          %s159 = scalar_select %p158, %s157, 3
          %s160 = smul.addr %s159, 8
          %s161 = scalar_lea.vmem %s2, %s160
          %s162 = smul.u32 4, %s22
        $region20: #{tpu_custom_call.1} parent=11 // pred_fallthru
          _
      $region12: #{tpu_custom_call.1} parent=5 // pred_fallthru
        _
      %p163 = scmp.lt.s32.totalorder %s12, 2
      // Predicated region
      $region21: #{tpu_custom_call.1} parent=5 // pred_check
        %p164 = pneg %p163
      $region22: #{tpu_custom_call.1} parent=5 // pred_check_branch
        %166 = sbr.rel (%p164) target = $region24
      $region23: #{tpu_custom_call.1} parent=5 // pred_region
        // Predicated region
        $region25: #{tpu_custom_call.1} parent=23 // pred_check
          %p167 = pneg %p44
        $region26: #{tpu_custom_call.1} parent=23 // pred_check_branch
          %169 = sbr.rel (%p167) target = $region28
        $region27: #{tpu_custom_call.1} parent=23 // pred_region
          %p170 = scmp.lt.s32.totalorder %s19, 1
          %s171 = scalar_select %p170, %s19, 1
          %s172 = smul.addr %s171, 2
          %s173 = smul.addr %s172, 4
          %s174 = scalar_lea.vmem %s0, %s173
        $region28: #{tpu_custom_call.1} parent=23 // pred_fallthru
          _
      $region24: #{tpu_custom_call.1} parent=5 // pred_fallthru
        _
      %p175 = scmp.le.s32.totalorder 1, %s12
      %p176 = scmp.lt.s32.totalorder %s12, 3
      %p177 = pnand %p175, %p176
      %p178 = pneg %p177
      // Predicated region
      $region29: #{tpu_custom_call.1} parent=5 // pred_check
        _
      $region30: #{tpu_custom_call.1} parent=5 // pred_check_branch
        %180 = sbr.rel (%p177) target = $region32
      $region31: #{tpu_custom_call.1} parent=5 // pred_region
        %s181 = ssub.s32 %s12, 1
        %p182 = scmp.lt.s32.totalorder %s21, 1
        %s183 = scalar_select %p182, %s21, 1
        %s184 = smul.addr %s183, 2
        %s185 = smul.addr %s184, 4
        %s186 = scalar_lea.vmem %s0, %s185
        %p187 = pneg %p50
        %p188 = pneg %p47
        %s189 = smul.u32 4, %s22
        %p190 = scmp.lt.s32.totalorder %s189, 3
        %s191 = scalar_select %p190, %s189, 3
        %s192 = smul.addr %s191, 4
        %s193 = scalar_lea.vmem %s1, %s192
        %p194 = pneg %p76
        %p195 = pneg %p73
        %s196 = smul.u32 4, %s22
        %p197 = scmp.lt.s32.totalorder %s196, 3
        %s198 = scalar_select %p197, %s196, 3
        %s199 = smul.addr %s198, 8
        %s200 = scalar_lea.vmem %s2, %s199
        %p201 = pneg %p102
        %p202 = pneg %p99
        %p203 = pneg %p130
        %p204 = pneg %p127
        %s205 = sand.u32 %s117, 1
        %s206 = scalar_lea.sflag [#allocation3], %s205
        %s207 = sand.u32 %s117, 1
        %s208 = smul.addr %s207, 64
        %s209 = scalar_lea.vmem [#allocation2], %s208
        %p210 = scmp.lt.s32.totalorder %s21, 1
        %s211 = scalar_select %p210, %s21, 1
        %s212 = smul.addr %s211, 2
        %s213 = smul.addr %s212, 4
        %s214 = scalar_lea.vmem %s0, %s213
        %s215 = smul.u32 4, %s22
        %p216 = scmp.lt.s32.totalorder %s215, 3
        %s217 = scalar_select %p216, %s215, 3
        %s218 = smul.addr %s217, 4
        %s219 = scalar_lea.vmem %s1, %s218
        %s220 = smul.u32 4, %s22
        %s221 = smul.u32 4, %s22
        %p222 = scmp.lt.s32.totalorder %s221, 3
        %s223 = scalar_select %p222, %s221, 3
        %s224 = smul.addr %s223, 8
        %s225 = scalar_lea.vmem %s2, %s224
        %s226 = smul.u32 4, %s22
        %s227 = smul.u32 4, %s22
        %v229 = vld [vmem:[%s214] sm:$0x77]
        %v231 = vcombine.high %v229, %v229
        %v233 = vpack.c.bf16 %v229, %v229
        %v234 = vpack.c.bf16 %v231, %v231
        %v235 = vld [vmem:[%s219] sm:$0xf]
        %v236 = vld [vmem:[%s219 + $0x4] sm:$0xf]
        %v237 = vld [vmem:[%s219 + $0x8] sm:$0xf]
        %v238 = vld [vmem:[%s219 + $0xc] sm:$0xf]
        %v239 = vld [vmem:[%s225] sm:$0xff]
        %v240 = vld [vmem:[%s225 + $0x8] sm:$0xff]
        %v241 = vld [vmem:[%s225 + $0x10] sm:$0xff]
        %v242 = vld [vmem:[%s225 + $0x18] sm:$0xff]
        %244 = vset.pattern.permute.xlu0 0
        %245 = vperm.xlu0 %244, %v239
        %v246 = vpop.permute.xlu0 %245
        %249 = vset.pattern.permute.xlu0 0
        %250 = vperm.xlu0 %249, %v240
        %v251 = vpop.permute.xlu0 %250
        %254 = vset.pattern.permute.xlu0 0
        %255 = vperm.xlu0 %254, %v241
        %v256 = vpop.permute.xlu0 %255
        %259 = vset.pattern.permute.xlu0 0
        %260 = vperm.xlu0 %259, %v242
        %v261 = vpop.permute.xlu0 %260
        %v267 = vunpack.c.l.b16 %v235
        %v268 = vunpack.c.l.b16 %v236
        %v269 = vunpack.c.l.b16 %v237
        %v270 = vunpack.c.l.b16 %v238
        %v271 = vpack.c.b16 %v268, %v267
        %v272 = vpack.c.b16 %v270, %v269
        %vm273 = vcmask 23552
        %v275 = vsel %vm273, %v271, 0
        %v278 = vsel %vm273, %v272, 0
        %vm280 = vcmask 1040384
        %vm281 = vcmask 1041408
        %v282 = vsel %vm280, 4294967295, 65535
        %v283 = vsel %vm281, %v282, 0
        %v285 = vand.u32 %v233, %v283
        %v288 = vand.u32 %v234, %v283
        %290 = vmatprep.subr.bf16.mxu0 %v288
        %291 = vmatpush1.bf16.msra.mxu0 %v285
        %292 = vmatprep.subr.bf16.mxu0 0
        %293 = vmatpush1.bf16.msra.mxu0 0
        %294 = vmatprep.subr.bf16.mxu0 0
        %295 = vmatpush1.bf16.msra.mxu0 0
        %296 = vmatprep.subr.bf16.mxu0 0
        %297 = vmatpush1.bf16.msra.mxu0 0
        %298 = vmatprep.subr.bf16.mxu0 0
        %299 = vmatpush1.bf16.msra.mxu0 0
        %300 = vmatprep.subr.bf16.mxu0 0
        %301 = vmatpush1.bf16.msra.mxu0 0
        %302 = vmatprep.subr.bf16.mxu0 0
        %303 = vmatpush1.bf16.msra.mxu0 0
        %304 = vmatprep.subr.bf16.mxu0 0
        %305 = vmatpush1.bf16.msra.mxu0 0
        %306 = vmatprep.subr.bf16.mxu0 0
        %307 = vmatpush1.bf16.msra.mxu0 0
        %308 = vmatprep.subr.bf16.mxu0 0
        %309 = vmatpush1.bf16.msra.mxu0 0
        %310 = vmatprep.subr.bf16.mxu0 0
        %311 = vmatpush1.bf16.msra.mxu0 0
        %312 = vmatprep.subr.bf16.mxu0 0
        %313 = vmatpush1.bf16.msra.mxu0 0
        %314 = vmatprep.subr.bf16.mxu0 0
        %315 = vmatpush1.bf16.msra.mxu0 0
        %316 = vmatprep.subr.bf16.mxu0 0
        %317 = vmatpush1.bf16.msra.mxu0 0
        %318 = vmatprep.subr.bf16.mxu0 0
        %319 = vmatpush1.bf16.msra.mxu0 0
        %320 = vmatprep.subr.bf16.mxu0 0
        %321 = vmatpush1.bf16.msra.mxu0 0
        %322 = vmatprep.mubr.bf16.mxu0 0
        %323 = vmatmul.mubr.bf16.gmra.mrb[0].mxu0 %v275
        %v324 = vpop.f32.mrb[0].mxu0
        %v325 = vadd.f32 %v246, %v324
        %v326 = vpop.f32.mrb[0].mxu0
        %v327 = vadd.f32 %v246, %v326
        %v328 = vpop.f32.mrb[0].mxu0
        %v329 = vadd.f32 %v251, %v328
        %v330 = vpop.f32.mrb[0].mxu0
        %v331 = vadd.f32 %v251, %v330
        %332 = vmatprep.mubr.bf16.mxu0 0
        %333 = vmatmul.mubr.bf16.gmra.mrb[0].mxu0 %v278
        %v334 = vpop.f32.mrb[0].mxu0
        %v335 = vadd.f32 %v256, %v334
        %v336 = vpop.f32.mrb[0].mxu0
        %v337 = vadd.f32 %v256, %v336
        %v338 = vpop.f32.mrb[0].mxu0
        %v339 = vadd.f32 %v261, %v338
        %v340 = vpop.f32.mrb[0].mxu0
        %v341 = vadd.f32 %v261, %v340
        %342 = vdwg.mxu0
        %343 = vst [vmem:[%s209] sm:$0xff] %v325
        %344 = vst [vmem:[%s209 + $0x8] sm:$0xff] %v327
        %345 = vst [vmem:[%s209 + $0x10] sm:$0xff] %v329
        %346 = vst [vmem:[%s209 + $0x18] sm:$0xff] %v331
        %347 = vst [vmem:[%s209 + $0x20] sm:$0xff] %v335
        %348 = vst [vmem:[%s209 + $0x28] sm:$0xff] %v337
        %349 = vst [vmem:[%s209 + $0x30] sm:$0xff] %v339
        %350 = vst [vmem:[%s209 + $0x38] sm:$0xff] %v341
        %s351 = sand.u32 %s117, 1
        %s352 = scalar_lea.sflag [#allocation3], %s351
        %s353 = sand.u32 %s117, 1
        %s354 = smul.addr %s353, 64
        %s355 = scalar_lea.vmem [#allocation2], %s354
        // Predicated region
        $region33: #{tpu_custom_call.1} parent=31 // pred_check
          %p356 = pneg %p127
        $region34: #{tpu_custom_call.1} parent=31 // pred_check_branch
          %358 = sbr.rel (%p356) target = $region36
        $region35: #{tpu_custom_call.1} parent=31 // pred_region
          %s359 = smul.u32 4, %s22
          %s361 = ssub.s32 1024, 1024
          %362 = vsyncadd %s352, %s361
          %s363 = smul.addr %s359, 2
          %s364 = smul.addr %s21, 8
          %s365 = sadd.s32 %s363, %s364
          %s366 = smul.addr %s365, 128
          %s367 = scalar_lea.hbm %s3, %s366
          %s368 = sshll.u32 %s355, 4
          %s369 = int_to_ptr.vmem [resolvable:$true] %s368
          %374 = dma.vmem_to_hbm [thread:$0]  %s369, 1024, %s367, %s352, 256, 256, 16
        $region36: #{tpu_custom_call.1} parent=31 // pred_fallthru
          _
      $region32: #{tpu_custom_call.1} parent=5 // pred_fallthru
        _
      %p375 = scmp.le.s32.totalorder 2, %s12
      // Predicated region
      $region37: #{tpu_custom_call.1} parent=5 // pred_check
        %p376 = pneg %p375
      $region38: #{tpu_custom_call.1} parent=5 // pred_check_branch
        %378 = sbr.rel (%p376) target = $region40
      $region39: #{tpu_custom_call.1} parent=5 // pred_region
        %s379 = ssub.s32 %s12, 2
        // Predicated region
        $region41: #{tpu_custom_call.1} parent=39 // pred_check
          %p380 = pneg %p133
        $region42: #{tpu_custom_call.1} parent=39 // pred_check_branch
          %382 = sbr.rel (%p380) target = $region44
        $region43: #{tpu_custom_call.1} parent=39 // pred_region
          %s383 = sand.u32 %s118, 1
          %s384 = scalar_lea.sflag [#allocation3], %s383
          %s385 = sand.u32 %s118, 1
          %s386 = smul.addr %s385, 64
          %s387 = scalar_lea.vmem [#allocation2], %s386
          %388 = dma.done %s384, 1024
        $region44: #{tpu_custom_call.1} parent=39 // pred_fallthru
          _
      $region40: #{tpu_custom_call.1} parent=5 // pred_fallthru
        _
    $region6: #{tpu_custom_call.1} parent=1 // loop_footer
      %s16 = sadd.s32 1, %s12
    $region7: #{tpu_custom_call.1} parent=1 // loop_footer_branch
      %11 = sbr.rel target = $region3
    $region8: #{tpu_custom_call.1} parent=1 // loop_exit
      _
    %389 = vsyncpa [#allocation3], 1
    %s390 = scalar_lea.sflag [#allocation3], 1
    %391 = vsyncpa %s390, 1

</llo_original>
